<compile_context>
chip_gen: v6e
topology: v6e:2x2x1
jax: 0.10.0
libtpu: 0.0.40
codegen_flags: <defaults>
</compile_context>

<pallas_src>
import functools

import jax
import jax.numpy as jnp
from jax.experimental import pallas as pl
from jax.experimental.pallas import tpu as pltpu


def _round_up(x, m):
    return ((x + m - 1) // m) * m


def actor_kernel(x_ref, w1_ref, b1_ref, w2_ref, b2_ref,
                 wh_ref, bh_ref, out_ref, *, action_dim):
    # fc1 + ReLU  (bf16 MXU inputs, f32 accumulate, f32 elementwise)
    x = x_ref[...]
    h1 = jnp.dot(x, w1_ref[...], preferred_element_type=jnp.float32) + b1_ref[...]
    h1 = jnp.maximum(h1, 0.0).astype(jnp.bfloat16)

    # fc2 + ReLU
    h2 = jnp.dot(h1, w2_ref[...], preferred_element_type=jnp.float32) + b2_ref[...]
    h2 = jnp.maximum(h2, 0.0).astype(jnp.bfloat16)

    # Packed heads: ONE matmul covers both fc_mean (lanes [0:A]) and fc_std
    # (lanes [A:2A]).  Apply both activations to the full vreg (EUP slack),
    # then select per lane.
    y = jnp.dot(h2, wh_ref[...], preferred_element_type=jnp.float32) + bh_ref[...]
    mean = jnp.tanh(y) * 2.0
    # numerically stable softplus
    sp = jnp.maximum(y, 0.0) + jnp.log(1.0 + jnp.exp(-jnp.abs(y)))
    std = sp + 0.001
    lane = jax.lax.broadcasted_iota(jnp.int32, y.shape, 1)
    out_ref[...] = jnp.where(lane < action_dim, mean, std)


@functools.partial(jax.jit, static_argnames=("batch_tile",))
def actor_forward(x, params, *, batch_tile=None):
    """Run the Actor forward pass with a fused Pallas TPU kernel.

    x      : (B, state_dim) float32
    params : dict with
             w1 (S,H), b1 (H,), w2 (H,H), b2 (H,),
             w_mean (H,A), b_mean (A,), w_std (H,A), b_std (A,)
    Returns (mean, std), each (B, A) float32.
    """
    B, S = x.shape
    H = params["w1"].shape[1]
    A = params["w_mean"].shape[1]

    # ---- batch tiling: multiple of 16 (bf16 sublane tile), capped at 512
    #      rows, and >= 2 grid steps for mid/large batches so the grid can
    #      pipeline and shard across v7x's two TensorCores. ----
    if batch_tile is None:
        if B <= 256:
            bm = _round_up(B, 16)                       # single tile, tiny B
        else:
            bm = min(_round_up((B + 1) // 2, 16), 512)  # >= 2 grid steps
    else:
        bm = batch_tile
    assert bm % 16 == 0, "batch_tile must be a multiple of 16 (bf16 sublane tiling)"

    B_pad = _round_up(B, bm)
    if B_pad != B:
        x = jnp.pad(x, ((0, B_pad - B), (0, 0)))

    # ---- pack both heads into one lane-dense tile of width round_up(2A,128):
    #      mean columns in lanes [0:A], std columns in lanes [A:2A]. ----
    A2 = 2 * A
    A2_pad = _round_up(A2, 128)
    wh = jnp.zeros((H, A2_pad), jnp.float32)
    wh = wh.at[:, :A].set(params["w_mean"])
    wh = wh.at[:, A:A2].set(params["w_std"])
    bh = jnp.zeros((1, A2_pad), jnp.float32)
    bh = bh.at[0, :A].set(params["b_mean"])
    bh = bh.at[0, A:A2].set(params["b_std"])

    # Biases as 2-D f32 rows so they broadcast cleanly inside the kernel.
    b1 = params["b1"].reshape(1, H).astype(jnp.float32)
    b2 = params["b2"].reshape(1, H).astype(jnp.float32)
    bh = bh.astype(jnp.float32)

    # bf16 MXU inputs (accumulation stays f32 inside the kernel).
    x_bf = x.astype(jnp.bfloat16)
    w1 = params["w1"].astype(jnp.bfloat16)
    w2 = params["w2"].astype(jnp.bfloat16)
    wh = wh.astype(jnp.bfloat16)

    grid = (B_pad // bm,)

    cost = pl.CostEstimate(
        flops=2 * B_pad * (S * H + H * H + H * A2_pad),
        transcendentals=3 * B_pad * A2_pad,  # tanh + exp + log per head element
        bytes_accessed=(B_pad * S * 2
                        + (S * H + H * H + H * A2_pad) * 2
                        + (2 * H + A2_pad) * 4
                        + B_pad * A2_pad * 4),
    )

    out_pad = pl.pallas_call(
        functools.partial(actor_kernel, action_dim=A),
        out_shape=jax.ShapeDtypeStruct((B_pad, A2_pad), jnp.float32),
        grid_spec=pltpu.PrefetchScalarGridSpec(
            num_scalar_prefetch=0,
            grid=grid,
            in_specs=[
                pl.BlockSpec((bm, S), lambda i: (i, 0)),       # x tile over batch
                pl.BlockSpec((S, H), lambda i: (0, 0)),        # w1 (resident)
                pl.BlockSpec((1, H), lambda i: (0, 0)),        # b1
                pl.BlockSpec((H, H), lambda i: (0, 0)),        # w2
                pl.BlockSpec((1, H), lambda i: (0, 0)),        # b2
                pl.BlockSpec((H, A2_pad), lambda i: (0, 0)),   # packed head weight
                pl.BlockSpec((1, A2_pad), lambda i: (0, 0)),   # packed head bias
            ],
            out_specs=pl.BlockSpec((bm, A2_pad), lambda i: (i, 0)),  # lane-dense
        ),
        compiler_params=pltpu.CompilerParams(
            dimension_semantics=("parallel",),
        ),
        cost_estimate=cost,
    )(x_bf, w1, b1, w2, b2, wh, bh)

    mean = out_pad[:B, :A]
    std = out_pad[:B, A:A2]
    return mean, std


def init_actor_params(key, state_dim, action_dim, hidden_dim=256):
    """Deterministic synthetic init (uniform like PyTorch's default fan_in bound)."""
    ks = jax.random.split(key, 8)

    def unif(k, shape, fan_in):
        bound = 1.0 / jnp.sqrt(fan_in)
        return jax.random.uniform(k, shape, jnp.float32, -bound, bound)

    return {
        "w1": unif(ks[0], (state_dim, hidden_dim), state_dim),
        "b1": unif(ks[1], (hidden_dim,), state_dim),
        "w2": unif(ks[2], (hidden_dim, hidden_dim), hidden_dim),
        "b2": unif(ks[3], (hidden_dim,), hidden_dim),
        "w_mean": unif(ks[4], (hidden_dim, action_dim), hidden_dim),
        "b_mean": unif(ks[5], (action_dim,), hidden_dim),
        "w_std": unif(ks[6], (hidden_dim, action_dim), hidden_dim),
        "b_std": unif(ks[7], (action_dim,), hidden_dim),
    }


def actor_ref(x, params):
    """Pure-JAX f32 reference for correctness check."""
    h1 = jnp.maximum(x @ params["w1"] + params["b1"], 0.0)
    h2 = jnp.maximum(h1 @ params["w2"] + params["b2"], 0.0)
    mean = jnp.tanh(h2 @ params["w_mean"] + params["b_mean"]) * 2.0
    std = jax.nn.softplus(h2 @ params["w_std"] + params["b_std"]) + 0.001
    return mean, std


# TODO(synk): select_action (Normal sampling + clamp) is host-side stochastic
# policy logic, not part of the forward pass; it is intentionally not a kernel.


if __name__ == "__main__":
    key = jax.random.PRNGKey(0)
    k_param, k_x = jax.random.split(key)

    batch, state_dim, action_dim, hidden_dim = 8, 4, 2, 32
    params = init_actor_params(k_param, state_dim, action_dim, hidden_dim)
    x = jax.random.normal(k_x, (batch, state_dim), jnp.float32)

    mean, std = actor_forward(x, params)
    mean = jax.block_until_ready(mean)
    std = jax.block_until_ready(std)

    mean_r, std_r = actor_ref(x, params)
    assert mean.shape == (batch, action_dim)
    assert std.shape == (batch, action_dim)
    # bf16 MXU inputs lose mantissa bits -> relaxed tolerance vs the f32 ref.
    assert jnp.allclose(mean, mean_r, atol=5e-2, rtol=5e-2)
    assert jnp.allclose(std, std_r, atol=5e-2, rtol=5e-2)
    assert bool(jnp.all(std > 0.0))

    print("KERNEL_OK")
</pallas_src>

<mosaic_0001>
module attributes {stable_mosaic.version = 11 : i64} {
  func.func @actor_kernel(%arg0: i32, %arg1: memref<16x4xbf16, #tpu.memory_space<vmem>>, %arg2: memref<4x32xbf16, #tpu.memory_space<vmem>>, %arg3: memref<1x32xf32, #tpu.memory_space<vmem>>, %arg4: memref<32x32xbf16, #tpu.memory_space<vmem>>, %arg5: memref<1x32xf32, #tpu.memory_space<vmem>>, %arg6: memref<32x128xbf16, #tpu.memory_space<vmem>>, %arg7: memref<1x128xf32, #tpu.memory_space<vmem>>, %arg8: memref<16x128xf32, #tpu.memory_space<vmem>>) attributes {dimension_semantics = [#tpu.dimension_semantics<parallel>], iteration_bounds = array<i64: 1>, scalar_prefetch = 0 : i64, scratch_operands = 0 : i64, tpu.core_type = #tpu.core_type<tc>, window_params = [{transform_indices = @transform_0, window_bounds = array<i64: 16, 4>}, {pipeline_mode = #tpu.pipeline_mode<synchronous>, transform_indices = @transform_1, window_bounds = array<i64: 4, 32>}, {pipeline_mode = #tpu.pipeline_mode<synchronous>, transform_indices = @transform_2, window_bounds = array<i64: 1, 32>}, {pipeline_mode = #tpu.pipeline_mode<synchronous>, transform_indices = @transform_3, window_bounds = array<i64: 32, 32>}, {pipeline_mode = #tpu.pipeline_mode<synchronous>, transform_indices = @transform_4, window_bounds = array<i64: 1, 32>}, {pipeline_mode = #tpu.pipeline_mode<synchronous>, transform_indices = @transform_5, window_bounds = array<i64: 32, 128>}, {pipeline_mode = #tpu.pipeline_mode<synchronous>, transform_indices = @transform_6, window_bounds = array<i64: 1, 128>}, {transform_indices = @transform_7, window_bounds = array<i64: 16, 128>}]} {
    %c0 = arith.constant 0 : index
    %c0_0 = arith.constant 0 : index
    %0 = vector.load %arg1[%c0, %c0_0] : memref<16x4xbf16, #tpu.memory_space<vmem>>, vector<16x4xbf16>
    %c0_1 = arith.constant 0 : index
    %c0_2 = arith.constant 0 : index
    %1 = vector.load %arg2[%c0_1, %c0_2] : memref<4x32xbf16, #tpu.memory_space<vmem>>, vector<4x32xbf16>
    %cst = arith.constant dense<0.000000e+00> : vector<16x32xf32>
    %2 = tpu.matmul %0, %1, %cst {dimension_numbers = #tpu.dot_dimension_numbers<[1], [0], [0], [1], [0, 0, 1, 1], [], []>} : vector<16x4xbf16>, vector<4x32xbf16>, vector<16x32xf32> -> vector<16x32xf32>
    %c0_3 = arith.constant 0 : index
    %c0_4 = arith.constant 0 : index
    %3 = vector.load %arg3[%c0_3, %c0_4] : memref<1x32xf32, #tpu.memory_space<vmem>>, vector<1x32xf32>
    %4 = vector.broadcast %3 : vector<1x32xf32> to vector<16x32xf32>
    %5 = arith.addf %2, %4 : vector<16x32xf32>
    %cst_5 = arith.constant 0.000000e+00 : f32
    %6 = vector.broadcast %cst_5 : f32 to vector<16x32xf32>
    %7 = arith.maximumf %5, %6 : vector<16x32xf32>
    %8 = arith.truncf %7 : vector<16x32xf32> to vector<16x32xbf16>
    %c0_6 = arith.constant 0 : index
    %c0_7 = arith.constant 0 : index
    %9 = vector.load %arg4[%c0_6, %c0_7] : memref<32x32xbf16, #tpu.memory_space<vmem>>, vector<32x32xbf16>
    %cst_8 = arith.constant dense<0.000000e+00> : vector<16x32xf32>
    %10 = tpu.matmul %8, %9, %cst_8 {dimension_numbers = #tpu.dot_dimension_numbers<[1], [0], [0], [1], [0, 0, 1, 1], [], []>} : vector<16x32xbf16>, vector<32x32xbf16>, vector<16x32xf32> -> vector<16x32xf32>
    %c0_9 = arith.constant 0 : index
    %c0_10 = arith.constant 0 : index
    %11 = vector.load %arg5[%c0_9, %c0_10] : memref<1x32xf32, #tpu.memory_space<vmem>>, vector<1x32xf32>
    %12 = vector.broadcast %11 : vector<1x32xf32> to vector<16x32xf32>
    %13 = arith.addf %10, %12 : vector<16x32xf32>
    %cst_11 = arith.constant 0.000000e+00 : f32
    %14 = vector.broadcast %cst_11 : f32 to vector<16x32xf32>
    %15 = arith.maximumf %13, %14 : vector<16x32xf32>
    %16 = arith.truncf %15 : vector<16x32xf32> to vector<16x32xbf16>
    %c0_12 = arith.constant 0 : index
    %c0_13 = arith.constant 0 : index
    %17 = vector.load %arg6[%c0_12, %c0_13] : memref<32x128xbf16, #tpu.memory_space<vmem>>, vector<32x128xbf16>
    %cst_14 = arith.constant dense<0.000000e+00> : vector<16x128xf32>
    %18 = tpu.matmul %16, %17, %cst_14 {dimension_numbers = #tpu.dot_dimension_numbers<[1], [0], [0], [1], [0, 0, 1, 1], [], []>} : vector<16x32xbf16>, vector<32x128xbf16>, vector<16x128xf32> -> vector<16x128xf32>
    %c0_15 = arith.constant 0 : index
    %c0_16 = arith.constant 0 : index
    %19 = vector.load %arg7[%c0_15, %c0_16] : memref<1x128xf32, #tpu.memory_space<vmem>>, vector<1x128xf32>
    %20 = vector.broadcast %19 : vector<1x128xf32> to vector<16x128xf32>
    %21 = arith.addf %18, %20 : vector<16x128xf32>
    %22 = math.tanh %21 : vector<16x128xf32>
    %cst_17 = arith.constant 2.000000e+00 : f32
    %23 = vector.broadcast %cst_17 : f32 to vector<16x128xf32>
    %24 = arith.mulf %22, %23 : vector<16x128xf32>
    %cst_18 = arith.constant 0.000000e+00 : f32
    %25 = vector.broadcast %cst_18 : f32 to vector<16x128xf32>
    %26 = arith.maximumf %21, %25 : vector<16x128xf32>
    %27 = math.absf %21 : vector<16x128xf32>
    %cst_19 = arith.constant 0.000000e+00 : f32
    %28 = vector.broadcast %cst_19 : f32 to vector<16x128xf32>
    %29 = arith.subf %28, %27 : vector<16x128xf32>
    %30 = math.exp %29 : vector<16x128xf32>
    %cst_20 = arith.constant 1.000000e+00 : f32
    %31 = vector.broadcast %cst_20 : f32 to vector<16x128xf32>
    %32 = arith.addf %31, %30 : vector<16x128xf32>
    %33 = math.log %32 : vector<16x128xf32>
    %34 = arith.addf %26, %33 : vector<16x128xf32>
    %cst_21 = arith.constant 1.000000e-03 : f32
    %35 = vector.broadcast %cst_21 : f32 to vector<16x128xf32>
    %36 = arith.addf %34, %35 : vector<16x128xf32>
    %37 = tpu.iota {dimensions = array<i32: 1>} : vector<16x128xi32>
    %c2_i32 = arith.constant 2 : i32
    %38 = vector.broadcast %c2_i32 : i32 to vector<16x128xi32>
    %39 = arith.cmpi slt, %37, %38 : vector<16x128xi32>
    %40 = arith.select %39, %24, %36 : vector<16x128xi1>, vector<16x128xf32>
    %c0_22 = arith.constant 0 : index
    %c0_23 = arith.constant 0 : index
    %41 = vector.load %arg8[%c0_22, %c0_23] : memref<16x128xf32, #tpu.memory_space<vmem>>, vector<16x128xf32>
    tpu.vector_store %arg8[%c0_22, %c0_23], %40 {strides = array<i32>} : memref<16x128xf32, #tpu.memory_space<vmem>>, vector<16x128xf32>,
    return
  }
  func.func @transform_0(%arg0: i32) -> (i32, i32) {
    %c0_i32 = arith.constant 0 : i32
    %c0_i32_0 = arith.constant 0 : i32
    return %arg0, %c0_i32 : i32, i32
  }
  func.func @transform_1(%arg0: i32) -> (i32, i32) {
    %c0_i32 = arith.constant 0 : i32
    %c0_i32_0 = arith.constant 0 : i32
    %c0_i32_1 = arith.constant 0 : i32
    return %c0_i32, %c0_i32_0 : i32, i32
  }
  func.func @transform_2(%arg0: i32) -> (i32, i32) {
    %c0_i32 = arith.constant 0 : i32
    %c0_i32_0 = arith.constant 0 : i32
    %c0_i32_1 = arith.constant 0 : i32
    return %c0_i32, %c0_i32_0 : i32, i32
  }
  func.func @transform_3(%arg0: i32) -> (i32, i32) {
    %c0_i32 = arith.constant 0 : i32
    %c0_i32_0 = arith.constant 0 : i32
    %c0_i32_1 = arith.constant 0 : i32
    return %c0_i32, %c0_i32_0 : i32, i32
  }
  func.func @transform_4(%arg0: i32) -> (i32, i32) {
    %c0_i32 = arith.constant 0 : i32
    %c0_i32_0 = arith.constant 0 : i32
    %c0_i32_1 = arith.constant 0 : i32
    return %c0_i32, %c0_i32_0 : i32, i32
  }
  func.func @transform_5(%arg0: i32) -> (i32, i32) {
    %c0_i32 = arith.constant 0 : i32
    %c0_i32_0 = arith.constant 0 : i32
    %c0_i32_1 = arith.constant 0 : i32
    return %c0_i32, %c0_i32_0 : i32, i32
  }
  func.func @transform_6(%arg0: i32) -> (i32, i32) {
    %c0_i32 = arith.constant 0 : i32
    %c0_i32_0 = arith.constant 0 : i32
    %c0_i32_1 = arith.constant 0 : i32
    return %c0_i32, %c0_i32_0 : i32, i32
  }
  func.func @transform_7(%arg0: i32) -> (i32, i32) {
    %c0_i32 = arith.constant 0 : i32
    %c0_i32_0 = arith.constant 0 : i32
    return %arg0, %c0_i32 : i32, i32
  }
}

</mosaic_0001>

<llo_original>
// kernel: actor_forward.1
$region0: #{actor_forward.1}
  #allocation0 [shape = 'u32[]', space=smem, size = 0x4, offset = 0x4, fixed_abs, tag = 'smem constant byte address 0x4 - core index']
  #allocation1 [shape = 'u32[144,128]{1,0:T(1,128)}', space=vmem, size = 0x12000, scoped, tag = 'internal scratch']
  %s0 = inlined_call_operand.vmem [shape: bf16[16,4], index: 0, kind: input, shape index: {}]
  %s1 = inlined_call_operand.vmem [shape: bf16[4,32], index: 1, kind: input, shape index: {}]
  %s2 = inlined_call_operand.vmem [shape: f32[1,32], index: 2, kind: input, shape index: {}]
  %s3 = inlined_call_operand.vmem [shape: bf16[32,32], index: 3, kind: input, shape index: {}]
  %s4 = inlined_call_operand.vmem [shape: f32[1,32], index: 4, kind: input, shape index: {}]
  %s5 = inlined_call_operand.vmem [shape: bf16[32,128], index: 5, kind: input, shape index: {}]
  %s6 = inlined_call_operand.vmem [shape: f32[1,128], index: 6, kind: input, shape index: {}]
  %s7 = inlined_call_operand.vmem [shape: f32[16,128], index: 7, kind: output, shape index: {}]
  %s8 = sld [smem:[#allocation0]]
  $region38: #{actor_forward.1} parent=0
    _
  %s10 = ssub.s32 1, %s8
  %s11 = scalar_select 0, %s10, %s8
  // Predicated region
  $region2: #{actor_forward.1} parent=0 // pred_check
    _
  $region3: #{actor_forward.1} parent=0 // pred_check_branch
    %13 = sbr.rel (0) target = $region5
  $region4: #{actor_forward.1} parent=0 // pred_region
    _
  $region5: #{actor_forward.1} parent=0 // pred_fallthru
    _
  // Predicated region
  $region6: #{actor_forward.1} parent=0 // pred_check
    _
  $region7: #{actor_forward.1} parent=0 // pred_check_branch
    %15 = sbr.rel (0) target = $region9
  $region8: #{actor_forward.1} parent=0 // pred_region
    _
  $region9: #{actor_forward.1} parent=0 // pred_fallthru
    _
  // Predicated region
  $region10: #{actor_forward.1} parent=0 // pred_check
    _
  $region11: #{actor_forward.1} parent=0 // pred_check_branch
    %17 = sbr.rel (0) target = $region13
  $region12: #{actor_forward.1} parent=0 // pred_region
    _
  $region13: #{actor_forward.1} parent=0 // pred_fallthru
    _
  // Predicated region
  $region14: #{actor_forward.1} parent=0 // pred_check
    _
  $region15: #{actor_forward.1} parent=0 // pred_check_branch
    %19 = sbr.rel (0) target = $region17
  $region16: #{actor_forward.1} parent=0 // pred_region
    _
  $region17: #{actor_forward.1} parent=0 // pred_fallthru
    _
  // Predicated region
  $region18: #{actor_forward.1} parent=0 // pred_check
    _
  $region19: #{actor_forward.1} parent=0 // pred_check_branch
    %21 = sbr.rel (0) target = $region21
  $region20: #{actor_forward.1} parent=0 // pred_region
    _
  $region21: #{actor_forward.1} parent=0 // pred_fallthru
    _
  // Predicated region
  $region22: #{actor_forward.1} parent=0 // pred_check
    _
  $region23: #{actor_forward.1} parent=0 // pred_check_branch
    %23 = sbr.rel (0) target = $region25
  $region24: #{actor_forward.1} parent=0 // pred_region
    _
  $region25: #{actor_forward.1} parent=0 // pred_fallthru
    _
  // Predicated region
  $region26: #{actor_forward.1} parent=0 // pred_check
    _
  $region27: #{actor_forward.1} parent=0 // pred_check_branch
    %25 = sbr.rel (0) target = $region29
  $region28: #{actor_forward.1} parent=0 // pred_region
    _
  $region29: #{actor_forward.1} parent=0 // pred_fallthru
    _
  %v27 = vld [vmem:[%s0] sm:$0xf]
  %v28 = vld [vmem:[%s0 + $0x4] sm:$0xf]
  %v29 = vld [vmem:[%s1] sm:$0x3]
  %v30 = vld [vmem:[%s2] sm:$0x1]
  %v32 = vlaneseq
  %v33 = vshrl.u32 %v32, 7
  %v34 = vsub.s32 0, %v33
  %v35 = vrot.slane %v30, %v34
  %v39 = vunpack.c.l.b16 %v27
  %v40 = vunpack.c.l.b16 %v28
  %v41 = vpack.c.b16 %v40, %v39
  %vm42 = vcmask 31744
  %v44 = vsel %vm42, %v41, 0
  %vm46 = vcmask 1041408
  %v48 = vsel %vm46, %v29, 0
  %50 = vmatprep.subr.bf16.mxu0 0
  %51 = vmatpush1.bf16.msra.mxu0 0
  %52 = vmatprep.subr.bf16.mxu0 0
  %53 = vmatpush1.bf16.msra.mxu0 0
  %54 = vmatprep.subr.bf16.mxu0 0
  %55 = vmatpush1.bf16.msra.mxu0 0
  %56 = vmatprep.subr.bf16.mxu0 0
  %57 = vmatpush1.bf16.msra.mxu0 0
  %58 = vmatprep.subr.bf16.mxu0 0
  %59 = vmatpush1.bf16.msra.mxu0 0
  %60 = vmatprep.subr.bf16.mxu0 0
  %61 = vmatpush1.bf16.msra.mxu0 0
  %62 = vmatprep.subr.bf16.mxu0 0
  %63 = vmatpush1.bf16.msra.mxu0 0
  %64 = vmatprep.subr.bf16.mxu0 0
  %65 = vmatpush1.bf16.msra.mxu0 %v48
  %66 = vmatprep.subr.bf16.mxu0 0
  %67 = vmatpush2.bf16.msra.mxu0 0
  %68 = vmatprep.subr.bf16.mxu0 0
  %69 = vmatpush2.bf16.msra.mxu0 0
  %70 = vmatprep.subr.bf16.mxu0 0
  %71 = vmatpush2.bf16.msra.mxu0 0
  %72 = vmatprep.subr.bf16.mxu0 0
  %73 = vmatpush2.bf16.msra.mxu0 0
  %74 = vmatprep.subr.bf16.mxu0 0
  %75 = vmatpush2.bf16.msra.mxu0 0
  %76 = vmatprep.subr.bf16.mxu0 0
  %77 = vmatpush2.bf16.msra.mxu0 0
  %78 = vmatprep.subr.bf16.mxu0 0
  %79 = vmatpush2.bf16.msra.mxu0 0
  %80 = vmatprep.subr.bf16.mxu0 0
  %81 = vmatpush2.bf16.msra.mxu0 0
  %82 = vmatprep.mubr.bf16.mxu0 0
  %83 = vmatmul.mubr.bf16.gmra.mxu0 %v44
  %v84 = vpop.f32.mrf.mxu0
  %v85 = vadd.f32 %v35, %v84
  %v86 = vpop.f32.mrf.mxu0
  %v87 = vpop.f32.mrf.mxu0
  %v88 = vadd.f32 %v35, %v87
  %v89 = vpop.f32.mrf.mxu0
  %90 = vdwg.mxu0
  %v91 = vmax.f32 %v85, 0.0
  %v92 = vmax.f32 %v88, 0.0
  %v93 = vpack.c.bf16 %v92, %v91
  %v94 = vld [vmem:[%s3] sm:$0xf]
  %v95 = vld [vmem:[%s3 + $0x4] sm:$0xf]
  %v96 = vld [vmem:[%s3 + $0x8] sm:$0xf]
  %v97 = vld [vmem:[%s3 + $0xc] sm:$0xf]
  %v98 = vld [vmem:[%s4] sm:$0x1]
  %v100 = vlaneseq
  %v101 = vshrl.u32 %v100, 7
  %v102 = vsub.s32 0, %v101
  %v103 = vrot.slane %v98, %v102
  %v109 = vunpack.c.l.b16 %v94
  %v110 = vunpack.c.l.b16 %v95
  %v111 = vunpack.c.l.b16 %v96
  %v112 = vunpack.c.l.b16 %v97
  %v113 = vpack.c.b16 %v110, %v109
  %v114 = vpack.c.b16 %v112, %v111
  %vm117 = vcmask 261120
  %v119 = vsel %vm117, %v93, 0
  %121 = vmatprep.subr.bf16.mxu0 0
  %122 = vmatpush1.bf16.msra.mxu0 0
  %123 = vmatprep.subr.bf16.mxu0 0
  %124 = vmatpush1.bf16.msra.mxu0 0
  %125 = vmatprep.subr.bf16.mxu0 0
  %126 = vmatpush1.bf16.msra.mxu0 0
  %127 = vmatprep.subr.bf16.mxu0 0
  %128 = vmatpush1.bf16.msra.mxu0 0
  %129 = vmatprep.subr.bf16.mxu0 0
  %130 = vmatpush1.bf16.msra.mxu0 0
  %131 = vmatprep.subr.bf16.mxu0 0
  %132 = vmatpush1.bf16.msra.mxu0 0
  %133 = vmatprep.subr.bf16.mxu0 0
  %134 = vmatpush1.bf16.msra.mxu0 %v114
  %135 = vmatprep.subr.bf16.mxu0 0
  %136 = vmatpush1.bf16.msra.mxu0 %v113
  %137 = vmatprep.subr.bf16.mxu0 0
  %138 = vmatpush2.bf16.msra.mxu0 0
  %139 = vmatprep.subr.bf16.mxu0 0
  %140 = vmatpush2.bf16.msra.mxu0 0
  %141 = vmatprep.subr.bf16.mxu0 0
  %142 = vmatpush2.bf16.msra.mxu0 0
  %143 = vmatprep.subr.bf16.mxu0 0
  %144 = vmatpush2.bf16.msra.mxu0 0
  %145 = vmatprep.subr.bf16.mxu0 0
  %146 = vmatpush2.bf16.msra.mxu0 0
  %147 = vmatprep.subr.bf16.mxu0 0
  %148 = vmatpush2.bf16.msra.mxu0 0
  %149 = vmatprep.subr.bf16.mxu0 0
  %150 = vmatpush2.bf16.msra.mxu0 0
  %151 = vmatprep.subr.bf16.mxu0 0
  %152 = vmatpush2.bf16.msra.mxu0 0
  %153 = vmatprep.mubr.bf16.mxu0 0
  %154 = vmatmul.mubr.bf16.gmra.mxu0 %v119
  %v155 = vpop.f32.mrf.mxu0
  %v156 = vadd.f32 %v103, %v155
  %v157 = vpop.f32.mrf.mxu0
  %v158 = vpop.f32.mrf.mxu0
  %v159 = vadd.f32 %v103, %v158
  %v160 = vpop.f32.mrf.mxu0
  %161 = vdwg.mxu0
  %v162 = vmax.f32 %v156, 0.0
  %v163 = vmax.f32 %v159, 0.0
  %v164 = vpack.c.bf16 %v163, %v162
  %v165 = vld [vmem:[%s5] sm:$0xf]
  %v166 = vld [vmem:[%s5 + $0x4] sm:$0xf]
  %v167 = vld [vmem:[%s5 + $0x8] sm:$0xf]
  %v168 = vld [vmem:[%s5 + $0xc] sm:$0xf]
  %v169 = vld [vmem:[%s6] sm:$0x1]
  %v171 = vlaneseq
  %v172 = vshrl.u32 %v171, 7
  %v173 = vsub.s32 0, %v172
  %v174 = vrot.slane %v169, %v173
  %v180 = vunpack.c.l.b16 %v165
  %v181 = vunpack.c.l.b16 %v166
  %v182 = vunpack.c.l.b16 %v167
  %v183 = vunpack.c.l.b16 %v168
  %v184 = vpack.c.b16 %v181, %v180
  %v185 = vpack.c.b16 %v183, %v182
  %v189 = vsel %vm117, %v164, 0
  %191 = vmatprep.subr.bf16.mxu0 0
  %192 = vmatpush1.bf16.msra.mxu0 0
  %193 = vmatprep.subr.bf16.mxu0 0
  %194 = vmatpush1.bf16.msra.mxu0 0
  %195 = vmatprep.subr.bf16.mxu0 0
  %196 = vmatpush1.bf16.msra.mxu0 0
  %197 = vmatprep.subr.bf16.mxu0 0
  %198 = vmatpush1.bf16.msra.mxu0 0
  %199 = vmatprep.subr.bf16.mxu0 0
  %200 = vmatpush1.bf16.msra.mxu0 0
  %201 = vmatprep.subr.bf16.mxu0 0
  %202 = vmatpush1.bf16.msra.mxu0 0
  %203 = vmatprep.subr.bf16.mxu0 0
  %204 = vmatpush1.bf16.msra.mxu0 %v185
  %205 = vmatprep.subr.bf16.mxu0 0
  %206 = vmatpush1.bf16.msra.mxu0 %v184
  %207 = vmatprep.subr.bf16.mxu0 0
  %208 = vmatpush2.bf16.msra.mxu0 0
  %209 = vmatprep.subr.bf16.mxu0 0
  %210 = vmatpush2.bf16.msra.mxu0 0
  %211 = vmatprep.subr.bf16.mxu0 0
  %212 = vmatpush2.bf16.msra.mxu0 0
  %213 = vmatprep.subr.bf16.mxu0 0
  %214 = vmatpush2.bf16.msra.mxu0 0
  %215 = vmatprep.subr.bf16.mxu0 0
  %216 = vmatpush2.bf16.msra.mxu0 0
  %217 = vmatprep.subr.bf16.mxu0 0
  %218 = vmatpush2.bf16.msra.mxu0 0
  %219 = vmatprep.subr.bf16.mxu0 0
  %220 = vmatpush2.bf16.msra.mxu0 0
  %221 = vmatprep.subr.bf16.mxu0 0
  %222 = vmatpush2.bf16.msra.mxu0 0
  %223 = vmatprep.mubr.bf16.mxu0 0
  %224 = vmatmul.mubr.bf16.gmra.mxu0 %v189
  %v225 = vpop.f32.mrf.mxu0
  %v226 = vadd.f32 %v174, %v225
  %v227 = vpop.f32.mrf.mxu0
  %v228 = vpop.f32.mrf.mxu0
  %v229 = vadd.f32 %v174, %v228
  %v230 = vpop.f32.mrf.mxu0
  %231 = vdwg.mxu0
  %v232 = vtanh.pop %v226
  %v233 = vtanh.pop %v229
  %v234 = vmul.f32 %v232, 2.0
  %v235 = vmul.f32 %v233, 2.0
  %v236 = vmax.f32 %v226, 0.0
  %v237 = vmax.f32 %v229, 0.0
  %v238 = vand.u32 2147483647, %v226
  %v239 = vand.u32 2147483647, %v229
  %v240 = vsub.f32 0.0, %v238
  %v241 = vsub.f32 0.0, %v239
  %v242 = vmul.f32 %v240, 1.442695
  %v243 = vpow.pop %v242
  %v244 = vmul.f32 %v241, 1.442695
  %v245 = vpow.pop %v244
  %v246 = vadd.f32 %v243, 1.0
  %v247 = vadd.f32 %v245, 1.0
  %v248 = vlog2.pop %v246
  %v249 = vmul.f32 %v248, 0.6931472
  %v250 = vlog2.pop %v247
  %v251 = vmul.f32 %v250, 0.6931472
  %v252 = vadd.f32 %v236, %v249
  %v253 = vadd.f32 %v237, %v251
  %v254 = vadd.f32 %v252, 0.001
  %v255 = vadd.f32 %v253, 0.001
  %v256 = vlaneseq
  %v257 = vand.u32 %v256, 127
  %vm258 = vcmp.lt.s32.totalorder %v257, 2
  %v259 = vsel %vm258, %v234, %v254
  %v260 = vsel %vm258, %v235, %v255
  %261 = vst [vmem:[%s7] sm:$0xff] %v259
  %262 = vst [vmem:[%s7 + $0x8] sm:$0xff] %v260
  // Predicated region
  $region30: #{actor_forward.1} parent=0 // pred_check
    _
  $region31: #{actor_forward.1} parent=0 // pred_check_branch
    %264 = sbr.rel (0) target = $region33
  $region32: #{actor_forward.1} parent=0 // pred_region
    _
  $region33: #{actor_forward.1} parent=0 // pred_fallthru
    _
  // Predicated region
  $region34: #{actor_forward.1} parent=0 // pred_check
    _
  $region35: #{actor_forward.1} parent=0 // pred_check_branch
    %266 = sbr.rel (0) target = $region37
  $region36: #{actor_forward.1} parent=0 // pred_region
    _
  $region37: #{actor_forward.1} parent=0 // pred_fallthru
    _

</llo_original>
